<compile_context>
chip_gen: v6e
topology: v6e:2x2x1
jax: 0.10.0
libtpu: 0.0.40
codegen_flags: <defaults>
</compile_context>

<pallas_src>
import functools

import jax
import jax.numpy as jnp
from jax.experimental import pallas as pl
from jax.experimental.pallas import tpu as pltpu

EPS = 1e-5
LANE = 128      # TPU lane width  (last dim)
SUBLANE = 8     # f32 sublane width (second-to-last dim)


def _round_up(n, m):
    return ((n + m - 1) // m) * m


# --------------------------------------------------------------------------
# Kernel
# --------------------------------------------------------------------------
def residual_block_kernel(
    x_ref,      # [Bp, Dp] f32   (zero-padded input)
    vecs_ref,   # [8,  Dp] f32   packed: ln_g, ln_b, b1, bn1_g, bn1_b, b2, bn2_g, bn2_b
    w1t_ref,    # [Dp, Dp] bf16  (fc1.weight.T, zero-padded)
    w2t_ref,    # [Dp, Dp] bf16  (fc2.weight.T, zero-padded)
    o_ref,      # [Bp, Dp] f32
    *,
    b_true: int,
    d_true: int,
):
    f32 = jnp.float32
    x = x_ref[...].astype(f32)
    vecs = vecs_ref[...]
    ln_g, ln_b = vecs[0:1, :], vecs[1:2, :]
    b1, bn1_g, bn1_b = vecs[2:3, :], vecs[3:4, :], vecs[4:5, :]
    b2, bn2_g, bn2_b = vecs[5:6, :], vecs[6:7, :], vecs[7:8, :]

    # ---- LayerNorm over the true D features (single-pass stats; padded cols
    #      are zero so they contribute nothing to the sums) ----
    inv_d = 1.0 / d_true
    mu = jnp.sum(x, axis=-1, keepdims=True) * inv_d
    ex2 = jnp.sum(x * x, axis=-1, keepdims=True) * inv_d
    var = jnp.maximum(ex2 - mu * mu, 0.0)
    xn = (x - mu) * jax.lax.rsqrt(var + EPS)
    xn = xn * ln_g + ln_b            # padded columns -> exactly 0 (ln_g/ln_b padded with 0)
    residual = xn                    # stays in the output dtype (f32)

    # Row mask so batch-padding rows never pollute BatchNorm statistics.
    bp = x.shape[0]
    row_ids = jax.lax.broadcasted_iota(jnp.int32, (bp, 1), 0)
    row_mask = (row_ids < b_true).astype(f32)
    inv_b = 1.0 / b_true

    # ---- fc1 on the MXU: bf16 operands, f32 accumulate ----
    h = jnp.dot(xn.astype(jnp.bfloat16), w1t_ref[...],
                preferred_element_type=f32) + b1

    # ---- bn1 (training-mode batch stats, biased var; single reduction pass) + ReLU ----
    hm = h * row_mask
    m1 = jnp.sum(hm, axis=0, keepdims=True) * inv_b
    e1 = jnp.sum(hm * h, axis=0, keepdims=True) * inv_b
    v1 = jnp.maximum(e1 - m1 * m1, 0.0)
    h = (h - m1) * jax.lax.rsqrt(v1 + EPS) * bn1_g + bn1_b
    h = jnp.maximum(h, 0.0)

    # ---- fc2 on the MXU ----
    out = jnp.dot(h.astype(jnp.bfloat16), w2t_ref[...],
                  preferred_element_type=f32) + b2

    # ---- bn2 ----
    om = out * row_mask
    m2 = jnp.sum(om, axis=0, keepdims=True) * inv_b
    e2 = jnp.sum(om * out, axis=0, keepdims=True) * inv_b
    v2 = jnp.maximum(e2 - m2 * m2, 0.0)
    out = (out - m2) * jax.lax.rsqrt(v2 + EPS) * bn2_g + bn2_b

    # ---- residual add + ReLU ----
    o_ref[...] = jnp.maximum(out + residual, 0.0).astype(o_ref.dtype)


# --------------------------------------------------------------------------
# Wrapper
# --------------------------------------------------------------------------
def init_params(key, D):
    """Raw parameters mirroring the PyTorch module (weights in nn.Linear layout)."""
    k1, k2, k3, k4 = jax.random.split(key, 4)
    bound = 1.0 / jnp.sqrt(D)
    return {
        "w1": jax.random.uniform(k1, (D, D), jnp.float32, -bound, bound),
        "b1": jax.random.uniform(k2, (D,), jnp.float32, -bound, bound),
        "w2": jax.random.uniform(k3, (D, D), jnp.float32, -bound, bound),
        "b2": jax.random.uniform(k4, (D,), jnp.float32, -bound, bound),
        "ln_g": jnp.ones((D,), jnp.float32),
        "ln_b": jnp.zeros((D,), jnp.float32),
        "bn1_g": jnp.ones((D,), jnp.float32),
        "bn1_b": jnp.zeros((D,), jnp.float32),
        "bn2_g": jnp.zeros((D,), jnp.float32),   # nn.init.constant_(bn2.weight, 0)
        "bn2_b": jnp.zeros((D,), jnp.float32),
    }


def prepare_params(params):
    """One-time prep: pad to lane width, pre-transpose weights, cast to bf16,
    pack all per-feature vectors into a single [8, Dp] array."""
    D = params["w1"].shape[0]
    Dp = max(_round_up(D, LANE), LANE)
    pad2 = ((0, Dp - D), (0, Dp - D))

    w1t = jnp.pad(params["w1"].T, pad2).astype(jnp.bfloat16)
    w2t = jnp.pad(params["w2"].T, pad2).astype(jnp.bfloat16)

    def pad_vec(v):
        return jnp.pad(v.reshape(-1).astype(jnp.float32), (0, Dp - D))

    vecs = jnp.stack([
        pad_vec(params["ln_g"]), pad_vec(params["ln_b"]),
        pad_vec(params["b1"]),
        pad_vec(params["bn1_g"]), pad_vec(params["bn1_b"]),
        pad_vec(params["b2"]),
        pad_vec(params["bn2_g"]), pad_vec(params["bn2_b"]),
    ])  # [8, Dp] f32

    return {"w1t": w1t, "w2t": w2t, "vecs": vecs, "d": D, "dp": Dp}


def residual_block(x, prep):
    """x: [B, D] float32.  prep: output of prepare_params."""
    B, D = x.shape
    assert D == prep["d"], "prepared params do not match input feature dim"
    Dp = prep["dp"]
    Bp = _round_up(B, SUBLANE)

    x_p = jnp.pad(x.astype(jnp.float32), ((0, Bp - B), (0, Dp - D)))

    kernel = functools.partial(residual_block_kernel, b_true=B, d_true=D)
    args = (x_p, prep["vecs"], prep["w1t"], prep["w2t"])

    def full_vmem(a):
        return pl.BlockSpec(a.shape, lambda: (0,) * a.ndim,
                            memory_space=pltpu.MemorySpace.VMEM)

    io_bytes = sum(int(a.nbytes) for a in args) + int(x_p.nbytes)
    vmem_limit = int(min(max(2 * io_bytes + (8 << 20), 32 << 20), 64 << 20))

    out_p = pl.pallas_call(
        kernel,
        out_shape=jax.ShapeDtypeStruct((Bp, Dp), x.dtype),
        grid=(),
        in_specs=[full_vmem(a) for a in args],
        out_specs=full_vmem(x_p),
        compiler_params=pltpu.CompilerParams(vmem_limit_bytes=vmem_limit),
    )(*args)

    return out_p[:B, :D]


# --------------------------------------------------------------------------
# Pure-JAX reference of the PyTorch forward (training-mode BN)
# --------------------------------------------------------------------------
def reference(x, p, matmul_dtype=jnp.float32):
    mu = jnp.mean(x, -1, keepdims=True)
    var = jnp.mean((x - mu) ** 2, -1, keepdims=True)
    xn = (x - mu) / jnp.sqrt(var + EPS) * p["ln_g"] + p["ln_b"]
    res = xn
    w1 = p["w1"].astype(matmul_dtype)
    w2 = p["w2"].astype(matmul_dtype)
    out = jnp.dot(xn.astype(matmul_dtype), w1.T,
                  preferred_element_type=jnp.float32) + p["b1"]
    bm, bv = jnp.mean(out, 0, keepdims=True), jnp.var(out, 0, keepdims=True)
    out = jnp.maximum((out - bm) / jnp.sqrt(bv + EPS) * p["bn1_g"] + p["bn1_b"], 0.0)
    out = jnp.dot(out.astype(matmul_dtype), w2.T,
                  preferred_element_type=jnp.float32) + p["b2"]
    bm, bv = jnp.mean(out, 0, keepdims=True), jnp.var(out, 0, keepdims=True)
    out = (out - bm) / jnp.sqrt(bv + EPS) * p["bn2_g"] + p["bn2_b"]
    return jnp.maximum(out + res, 0.0)


if __name__ == "__main__":
    key = jax.random.PRNGKey(0)
    kx, kp, kr = jax.random.split(key, 3)
    B, D = 8, 32          # small (N, C) input, consistent with BatchNorm1d
    x = jax.random.normal(kx, (B, D), jnp.float32)

    # --- 1) Faithful module init (bn2 gamma = 0) -------------------------
    params = init_params(kp, D)
    prep = prepare_params(params)
    out = jax.block_until_ready(residual_block(x, prep))
    assert out.shape == (B, D)
    ref32 = reference(x, params)
    assert jnp.allclose(out, ref32, atol=1e-4, rtol=1e-4), "mismatch (default init)"

    # --- 2) Randomized affines (bn2 gamma != 0) so the matmul path matters
    ks = jax.random.split(kr, 6)
    params2 = dict(params)
    params2["ln_b"] = 0.1 * jax.random.normal(ks[0], (D,), jnp.float32)
    params2["bn1_g"] = 1.0 + 0.1 * jax.random.normal(ks[1], (D,), jnp.float32)
    params2["bn1_b"] = 0.1 * jax.random.normal(ks[2], (D,), jnp.float32)
    params2["bn2_g"] = 1.0 + 0.1 * jax.random.normal(ks[3], (D,), jnp.float32)
    params2["bn2_b"] = 0.1 * jax.random.normal(ks[4], (D,), jnp.float32)
    prep2 = prepare_params(params2)
    out2 = jax.block_until_ready(residual_block(x, prep2))

    # Tight check vs a reference that uses the same bf16 MXU operand casting.
    ref_bf16 = reference(x, params2, matmul_dtype=jnp.bfloat16)
    assert jnp.allclose(out2, ref_bf16, atol=1e-2, rtol=1e-2), "mismatch (bf16-matched ref)"
    # Loose sanity check vs the pure-f32 reference (bf16 MXU rounding expected).
    ref_f32 = reference(x, params2)
    assert jnp.allclose(out2, ref_f32, atol=1e-1, rtol=1e-1), "mismatch (f32 ref)"

    print("KERNEL_OK")
</pallas_src>

<mosaic_0001>
module attributes {stable_mosaic.version = 11 : i64} {
  func.func @residual_block_kernel(%arg0: memref<8x128xf32, #tpu.memory_space<vmem>>, %arg1: memref<8x128xf32, #tpu.memory_space<vmem>>, %arg2: memref<128x128xbf16, #tpu.memory_space<vmem>>, %arg3: memref<128x128xbf16, #tpu.memory_space<vmem>>, %arg4: memref<8x128xf32, #tpu.memory_space<vmem>>) attributes {dimension_semantics = [], scalar_prefetch = 0 : i64, scratch_operands = 0 : i64, tpu.core_type = #tpu.core_type<tc>} {
    %c0 = arith.constant 0 : index
    %c0_0 = arith.constant 0 : index
    %0 = vector.load %arg0[%c0, %c0_0] : memref<8x128xf32, #tpu.memory_space<vmem>>, vector<8x128xf32>
    %c0_1 = arith.constant 0 : index
    %c0_2 = arith.constant 0 : index
    %1 = vector.load %arg1[%c0_1, %c0_2] : memref<8x128xf32, #tpu.memory_space<vmem>>, vector<8x128xf32>
    %2 = vector.extract_strided_slice %1 {offsets = [0, 0], sizes = [1, 128], strides = [1, 1]} : vector<8x128xf32> to vector<1x128xf32>
    %3 = vector.extract_strided_slice %1 {offsets = [1, 0], sizes = [1, 128], strides = [1, 1]} : vector<8x128xf32> to vector<1x128xf32>
    %4 = vector.extract_strided_slice %1 {offsets = [2, 0], sizes = [1, 128], strides = [1, 1]} : vector<8x128xf32> to vector<1x128xf32>
    %5 = vector.extract_strided_slice %1 {offsets = [3, 0], sizes = [1, 128], strides = [1, 1]} : vector<8x128xf32> to vector<1x128xf32>
    %6 = vector.extract_strided_slice %1 {offsets = [4, 0], sizes = [1, 128], strides = [1, 1]} : vector<8x128xf32> to vector<1x128xf32>
    %7 = vector.extract_strided_slice %1 {offsets = [5, 0], sizes = [1, 128], strides = [1, 1]} : vector<8x128xf32> to vector<1x128xf32>
    %8 = vector.extract_strided_slice %1 {offsets = [6, 0], sizes = [1, 128], strides = [1, 1]} : vector<8x128xf32> to vector<1x128xf32>
    %9 = vector.extract_strided_slice %1 {offsets = [7, 0], sizes = [1, 128], strides = [1, 1]} : vector<8x128xf32> to vector<1x128xf32>
    %cst = arith.constant dense<0.000000e+00> : vector<8xf32>
    %10 = vector.multi_reduction <add>, %0, %cst [1] : vector<8x128xf32> to vector<8xf32>
    %11 = vector.shape_cast %10 : vector<8xf32> to vector<8x1xf32>
    %cst_3 = arith.constant 3.125000e-02 : f32
    %12 = vector.broadcast %cst_3 : f32 to vector<8x1xf32>
    %13 = arith.mulf %11, %12 : vector<8x1xf32>
    %14 = arith.mulf %0, %0 : vector<8x128xf32>
    %cst_4 = arith.constant dense<0.000000e+00> : vector<8xf32>
    %15 = vector.multi_reduction <add>, %14, %cst_4 [1] : vector<8x128xf32> to vector<8xf32>
    %16 = vector.shape_cast %15 : vector<8xf32> to vector<8x1xf32>
    %cst_5 = arith.constant 3.125000e-02 : f32
    %17 = vector.broadcast %cst_5 : f32 to vector<8x1xf32>
    %18 = arith.mulf %16, %17 : vector<8x1xf32>
    %19 = arith.mulf %13, %13 : vector<8x1xf32>
    %20 = arith.subf %18, %19 : vector<8x1xf32>
    %cst_6 = arith.constant 0.000000e+00 : f32
    %21 = vector.broadcast %cst_6 : f32 to vector<8x1xf32>
    %22 = arith.maximumf %20, %21 : vector<8x1xf32>
    %23 = vector.broadcast %13 : vector<8x1xf32> to vector<8x128xf32>
    %24 = arith.subf %0, %23 : vector<8x128xf32>
    %cst_7 = arith.constant 9.99999974E-6 : f32
    %25 = vector.broadcast %cst_7 : f32 to vector<8x1xf32>
    %26 = arith.addf %22, %25 : vector<8x1xf32>
    %27 = math.rsqrt %26 : vector<8x1xf32>
    %28 = vector.broadcast %27 : vector<8x1xf32> to vector<8x128xf32>
    %29 = arith.mulf %24, %28 : vector<8x128xf32>
    %30 = vector.broadcast %2 : vector<1x128xf32> to vector<8x128xf32>
    %31 = arith.mulf %29, %30 : vector<8x128xf32>
    %32 = vector.broadcast %3 : vector<1x128xf32> to vector<8x128xf32>
    %33 = arith.addf %31, %32 : vector<8x128xf32>
    %34 = tpu.iota {dimensions = array<i32: 0>} : vector<8x1xi32>
    %c8_i32 = arith.constant 8 : i32
    %35 = vector.broadcast %c8_i32 : i32 to vector<8x1xi32>
    %36 = arith.cmpi slt, %34, %35 : vector<8x1xi32>
    %37 = arith.extui %36 : vector<8x1xi1> to vector<8x1xi32>
    %38 = arith.sitofp %37 : vector<8x1xi32> to vector<8x1xf32>
    %39 = arith.truncf %33 : vector<8x128xf32> to vector<8x128xbf16>
    %c0_8 = arith.constant 0 : index
    %c0_9 = arith.constant 0 : index
    %40 = vector.load %arg2[%c0_8, %c0_9] : memref<128x128xbf16, #tpu.memory_space<vmem>>, vector<128x128xbf16>
    %cst_10 = arith.constant dense<0.000000e+00> : vector<8x128xf32>
    %41 = tpu.matmul %39, %40, %cst_10 {dimension_numbers = #tpu.dot_dimension_numbers<[1], [0], [0], [1], [0, 0, 1, 1], [], []>} : vector<8x128xbf16>, vector<128x128xbf16>, vector<8x128xf32> -> vector<8x128xf32>
    %42 = vector.broadcast %4 : vector<1x128xf32> to vector<8x128xf32>
    %43 = arith.addf %41, %42 : vector<8x128xf32>
    %44 = vector.broadcast %38 : vector<8x1xf32> to vector<8x128xf32>
    %45 = arith.mulf %43, %44 : vector<8x128xf32>
    %cst_11 = arith.constant dense<0.000000e+00> : vector<128xf32>
    %46 = vector.multi_reduction <add>, %45, %cst_11 [0] : vector<8x128xf32> to vector<128xf32>
    %47 = vector.shape_cast %46 : vector<128xf32> to vector<1x128xf32>
    %cst_12 = arith.constant 1.250000e-01 : f32
    %48 = vector.broadcast %cst_12 : f32 to vector<1x128xf32>
    %49 = arith.mulf %47, %48 : vector<1x128xf32>
    %50 = arith.mulf %45, %43 : vector<8x128xf32>
    %cst_13 = arith.constant dense<0.000000e+00> : vector<128xf32>
    %51 = vector.multi_reduction <add>, %50, %cst_13 [0] : vector<8x128xf32> to vector<128xf32>
    %52 = vector.shape_cast %51 : vector<128xf32> to vector<1x128xf32>
    %cst_14 = arith.constant 1.250000e-01 : f32
    %53 = vector.broadcast %cst_14 : f32 to vector<1x128xf32>
    %54 = arith.mulf %52, %53 : vector<1x128xf32>
    %55 = arith.mulf %49, %49 : vector<1x128xf32>
    %56 = arith.subf %54, %55 : vector<1x128xf32>
    %cst_15 = arith.constant 0.000000e+00 : f32
    %57 = vector.broadcast %cst_15 : f32 to vector<1x128xf32>
    %58 = arith.maximumf %56, %57 : vector<1x128xf32>
    %59 = vector.broadcast %49 : vector<1x128xf32> to vector<8x128xf32>
    %60 = arith.subf %43, %59 : vector<8x128xf32>
    %cst_16 = arith.constant 9.99999974E-6 : f32
    %61 = vector.broadcast %cst_16 : f32 to vector<1x128xf32>
    %62 = arith.addf %58, %61 : vector<1x128xf32>
    %63 = math.rsqrt %62 : vector<1x128xf32>
    %64 = vector.broadcast %63 : vector<1x128xf32> to vector<8x128xf32>
    %65 = arith.mulf %60, %64 : vector<8x128xf32>
    %66 = vector.broadcast %5 : vector<1x128xf32> to vector<8x128xf32>
    %67 = arith.mulf %65, %66 : vector<8x128xf32>
    %68 = vector.broadcast %6 : vector<1x128xf32> to vector<8x128xf32>
    %69 = arith.addf %67, %68 : vector<8x128xf32>
    %cst_17 = arith.constant 0.000000e+00 : f32
    %70 = vector.broadcast %cst_17 : f32 to vector<8x128xf32>
    %71 = arith.maximumf %69, %70 : vector<8x128xf32>
    %72 = arith.truncf %71 : vector<8x128xf32> to vector<8x128xbf16>
    %c0_18 = arith.constant 0 : index
    %c0_19 = arith.constant 0 : index
    %73 = vector.load %arg3[%c0_18, %c0_19] : memref<128x128xbf16, #tpu.memory_space<vmem>>, vector<128x128xbf16>
    %cst_20 = arith.constant dense<0.000000e+00> : vector<8x128xf32>
    %74 = tpu.matmul %72, %73, %cst_20 {dimension_numbers = #tpu.dot_dimension_numbers<[1], [0], [0], [1], [0, 0, 1, 1], [], []>} : vector<8x128xbf16>, vector<128x128xbf16>, vector<8x128xf32> -> vector<8x128xf32>
    %75 = vector.broadcast %7 : vector<1x128xf32> to vector<8x128xf32>
    %76 = arith.addf %74, %75 : vector<8x128xf32>
    %77 = vector.broadcast %38 : vector<8x1xf32> to vector<8x128xf32>
    %78 = arith.mulf %76, %77 : vector<8x128xf32>
    %cst_21 = arith.constant dense<0.000000e+00> : vector<128xf32>
    %79 = vector.multi_reduction <add>, %78, %cst_21 [0] : vector<8x128xf32> to vector<128xf32>
    %80 = vector.shape_cast %79 : vector<128xf32> to vector<1x128xf32>
    %cst_22 = arith.constant 1.250000e-01 : f32
    %81 = vector.broadcast %cst_22 : f32 to vector<1x128xf32>
    %82 = arith.mulf %80, %81 : vector<1x128xf32>
    %83 = arith.mulf %78, %76 : vector<8x128xf32>
    %cst_23 = arith.constant dense<0.000000e+00> : vector<128xf32>
    %84 = vector.multi_reduction <add>, %83, %cst_23 [0] : vector<8x128xf32> to vector<128xf32>
    %85 = vector.shape_cast %84 : vector<128xf32> to vector<1x128xf32>
    %cst_24 = arith.constant 1.250000e-01 : f32
    %86 = vector.broadcast %cst_24 : f32 to vector<1x128xf32>
    %87 = arith.mulf %85, %86 : vector<1x128xf32>
    %88 = arith.mulf %82, %82 : vector<1x128xf32>
    %89 = arith.subf %87, %88 : vector<1x128xf32>
    %cst_25 = arith.constant 0.000000e+00 : f32
    %90 = vector.broadcast %cst_25 : f32 to vector<1x128xf32>
    %91 = arith.maximumf %89, %90 : vector<1x128xf32>
    %92 = vector.broadcast %82 : vector<1x128xf32> to vector<8x128xf32>
    %93 = arith.subf %76, %92 : vector<8x128xf32>
    %cst_26 = arith.constant 9.99999974E-6 : f32
    %94 = vector.broadcast %cst_26 : f32 to vector<1x128xf32>
    %95 = arith.addf %91, %94 : vector<1x128xf32>
    %96 = math.rsqrt %95 : vector<1x128xf32>
    %97 = vector.broadcast %96 : vector<1x128xf32> to vector<8x128xf32>
    %98 = arith.mulf %93, %97 : vector<8x128xf32>
    %99 = vector.broadcast %8 : vector<1x128xf32> to vector<8x128xf32>
    %100 = arith.mulf %98, %99 : vector<8x128xf32>
    %101 = vector.broadcast %9 : vector<1x128xf32> to vector<8x128xf32>
    %102 = arith.addf %100, %101 : vector<8x128xf32>
    %103 = arith.addf %102, %33 : vector<8x128xf32>
    %cst_27 = arith.constant 0.000000e+00 : f32
    %104 = vector.broadcast %cst_27 : f32 to vector<8x128xf32>
    %105 = arith.maximumf %103, %104 : vector<8x128xf32>
    %c0_28 = arith.constant 0 : index
    %c0_29 = arith.constant 0 : index
    %106 = vector.load %arg4[%c0_28, %c0_29] : memref<8x128xf32, #tpu.memory_space<vmem>>, vector<8x128xf32>
    tpu.vector_store %arg4[%c0_28, %c0_29], %105 {strides = array<i32>} : memref<8x128xf32, #tpu.memory_space<vmem>>, vector<8x128xf32>,
    return
  }
}

</mosaic_0001>

<llo_original>
// kernel: tpu_custom_call.1
$region0: #{tpu_custom_call.1}
  #allocation0 [shape = 'u32[]', space=smem, size = 0x4, offset = 0x4, fixed_abs, tag = 'smem constant byte address 0x4 - core index']
  #allocation1 [shape = 'u32[144,128]{1,0:T(1,128)}', space=vmem, size = 0x12000, scoped, tag = 'internal scratch']
  %s0 = inlined_call_operand.hbm [shape: f32[8,128], index: 0, kind: input, shape index: {}]
  %s1 = inlined_call_operand.hbm [shape: f32[8,128], index: 1, kind: input, shape index: {}]
  %s2 = inlined_call_operand.hbm [shape: bf16[128,128], index: 2, kind: input, shape index: {}]
  %s3 = inlined_call_operand.hbm [shape: bf16[128,128], index: 3, kind: input, shape index: {}]
  %s4 = inlined_call_operand.hbm [shape: f32[8,128], index: 4, kind: output, shape index: {}]
  %s5 = sld [smem:[#allocation0]]
  $region42: #{tpu_custom_call.1} parent=0
    _
  %s7 = ssub.s32 1, %s5
  %s8 = scalar_select 0, %s7, %s5
  $region1: #{tpu_custom_call.1} parent=0
    #allocation2 [shape = 'u8[4096]{0}', space=vmem, size = 0x1000, scoped, tag = 'input window, operand 0, single buffered']
    #allocation3 [shape = 's32[1]{0}', space=sflag, size = 0x4, scoped, tag = 'scoped memory for tpu_custom_call.1']
    #allocation4 [shape = 's32[1]{0}', space=sflag, size = 0x4, scoped, tag = 'scoped memory for tpu_custom_call.1']
    #allocation5 [shape = 'u8[4096]{0}', space=vmem, size = 0x1000, scoped, tag = 'input window, operand 1, single buffered']
    #allocation6 [shape = 's32[1]{0}', space=sflag, size = 0x4, scoped, tag = 'scoped memory for tpu_custom_call.1']
    #allocation7 [shape = 'u8[32768]{0}', space=vmem, size = 0x8000, scoped, tag = 'input window, operand 2, single buffered']
    #allocation8 [shape = 'u8[32768]{0}', space=vmem, size = 0x8000, scoped, tag = 'input window, operand 3, single buffered']
    #allocation9 [shape = 's32[1]{0}', space=sflag, size = 0x4, scoped, tag = 'scoped memory for tpu_custom_call.1']
    #allocation10 [shape = 'u8[4096]{0}', space=vmem, size = 0x1000, scoped, tag = 'output window, operand 0, single buffered']
    %9 = vsyncpa [#allocation3], 0
    %10 = vsyncpa [#allocation6], 0
    %11 = vsyncpa [#allocation9], 0
    %12 = vsyncpa [#allocation4], 0
    // Predicated region
    $region2: #{tpu_custom_call.1} parent=1 // pred_check
      _
    $region3: #{tpu_custom_call.1} parent=1 // pred_check_branch
      %14 = sbr.rel (0) target = $region5
    $region4: #{tpu_custom_call.1} parent=1 // pred_region
      %s16 = ssub.s32 128, 128
      %17 = vsyncadd [#allocation3], %s16
      %s19 = sshll.u32 [#allocation2], 4
      %s20 = int_to_ptr.vmem [resolvable:$true] %s19
      %22 = dma.hbm_to_vmem [thread:$0]  %s0, 128, %s20, [#allocation3]
    $region5: #{tpu_custom_call.1} parent=1 // pred_fallthru
      _
    // Predicated region
    $region6: #{tpu_custom_call.1} parent=1 // pred_check
      _
    $region7: #{tpu_custom_call.1} parent=1 // pred_check_branch
      %24 = sbr.rel (0) target = $region9
    $region8: #{tpu_custom_call.1} parent=1 // pred_region
      %s26 = ssub.s32 128, 128
      %27 = vsyncadd [#allocation6], %s26
      %s29 = sshll.u32 [#allocation5], 4
      %s30 = int_to_ptr.vmem [resolvable:$true] %s29
      %32 = dma.hbm_to_vmem [thread:$0]  %s1, 128, %s30, [#allocation6]
    $region9: #{tpu_custom_call.1} parent=1 // pred_fallthru
      _
    // Predicated region
    $region10: #{tpu_custom_call.1} parent=1 // pred_check
      _
    $region11: #{tpu_custom_call.1} parent=1 // pred_check_branch
      %34 = sbr.rel (0) target = $region13
    $region12: #{tpu_custom_call.1} parent=1 // pred_region
      %s36 = ssub.s32 1024, 1024
      %37 = vsyncadd [#allocation6], %s36
      %s38 = sshll.u32 [#allocation7], 4
      %s39 = int_to_ptr.vmem [resolvable:$true] %s38
      %44 = dma.hbm_to_vmem [thread:$0]  %s2, 1024, %s39, [#allocation6], 64, 64, 4
    $region13: #{tpu_custom_call.1} parent=1 // pred_fallthru
      _
    // Predicated region
    $region14: #{tpu_custom_call.1} parent=1 // pred_check
      _
    $region15: #{tpu_custom_call.1} parent=1 // pred_check_branch
      %46 = sbr.rel (0) target = $region17
    $region16: #{tpu_custom_call.1} parent=1 // pred_region
      %s48 = ssub.s32 1024, 1024
      %49 = vsyncadd [#allocation9], %s48
      %s50 = sshll.u32 [#allocation8], 4
      %s51 = int_to_ptr.vmem [resolvable:$true] %s50
      %56 = dma.hbm_to_vmem [thread:$0]  %s3, 1024, %s51, [#allocation9], 64, 64, 4
    $region17: #{tpu_custom_call.1} parent=1 // pred_fallthru
      _
    // Predicated region
    $region18: #{tpu_custom_call.1} parent=1 // pred_check
      _
    $region19: #{tpu_custom_call.1} parent=1 // pred_check_branch
      %58 = sbr.rel (0) target = $region21
    $region20: #{tpu_custom_call.1} parent=1 // pred_region
      %59 = dma.done [#allocation3], 128
    $region21: #{tpu_custom_call.1} parent=1 // pred_fallthru
      _
    // Predicated region
    $region22: #{tpu_custom_call.1} parent=1 // pred_check
      _
    $region23: #{tpu_custom_call.1} parent=1 // pred_check_branch
      %61 = sbr.rel (0) target = $region25
    $region24: #{tpu_custom_call.1} parent=1 // pred_region
      %62 = dma.done [#allocation6], 128
    $region25: #{tpu_custom_call.1} parent=1 // pred_fallthru
      _
    // Predicated region
    $region26: #{tpu_custom_call.1} parent=1 // pred_check
      _
    $region27: #{tpu_custom_call.1} parent=1 // pred_check_branch
      %64 = sbr.rel (0) target = $region29
    $region28: #{tpu_custom_call.1} parent=1 // pred_region
      %65 = dma.done [#allocation6], 1024
    $region29: #{tpu_custom_call.1} parent=1 // pred_fallthru
      _
    // Predicated region
    $region30: #{tpu_custom_call.1} parent=1 // pred_check
      _
    $region31: #{tpu_custom_call.1} parent=1 // pred_check_branch
      %67 = sbr.rel (0) target = $region33
    $region32: #{tpu_custom_call.1} parent=1 // pred_region
      %68 = dma.done [#allocation9], 1024
    $region33: #{tpu_custom_call.1} parent=1 // pred_fallthru
      _
    %v70 = vld [vmem:[#allocation2] sm:$0xff]
    %v71 = vld [vmem:[#allocation5] sm:$0xff]
    %72 = vadd.xlane.f32.xlu0 %v70
    %v73 = vpop.xlane.xlu0 %72
    %v74 = vmul.f32 %v73, 0.03125
    %v75 = vmul.f32 %v70, %v70
    %76 = vadd.xlane.f32.xlu0 %v75
    %v77 = vpop.xlane.xlu0 %76
    %v78 = vmul.f32 %v77, 0.03125
    %v79 = vmul.f32 %v74, %v74
    %v80 = vsub.f32 %v78, %v79
    %v81 = vmax.f32 %v80, 0.0
    %v82 = vsub.f32 %v70, %v74
    %v83 = vadd.f32 %v81, 1e-05
    %v84 = vrsqrt.pop %v83
    %v85 = vmul.f32 %v82, %v84
    %v86 = vlaneseq
    %v87 = vshrl.u32 %v86, 7
    %v88 = vsub.s32 0, %v87
    %v89 = vrot.slane %v71, %v88
    %v90 = vmul.f32 %v85, %v89
    %v91 = vlaneseq
    %v92 = vshrl.u32 %v91, 7
    %v93 = vsub.s32 1, %v92
    %v94 = vrot.slane %v71, %v93
    %v95 = vadd.f32 %v90, %v94
    %v96 = vlaneseq
    %v97 = vshrl.u32 %v96, 7
    %vm98 = vcmp.lt.s32.totalorder %v97, 8
    %v99 = vsel %vm98, 1, 0
    %v100 = vcvt.s32.f32 %v99
    %v101 = vpack.c.bf16 %v95, %v95
    %v102 = vld [vmem:[#allocation7] sm:$0xf]
    %v103 = vld [vmem:[#allocation7 + $0x4] sm:$0xf]
    %v104 = vld [vmem:[#allocation7 + $0x8] sm:$0xf]
    %v105 = vld [vmem:[#allocation7 + $0xc] sm:$0xf]
    %v106 = vld [vmem:[#allocation7 + $0x10] sm:$0xf]
    %v107 = vld [vmem:[#allocation7 + $0x14] sm:$0xf]
    %v108 = vld [vmem:[#allocation7 + $0x18] sm:$0xf]
    %v109 = vld [vmem:[#allocation7 + $0x1c] sm:$0xf]
    %v110 = vld [vmem:[#allocation7 + $0x20] sm:$0xf]
    %v111 = vld [vmem:[#allocation7 + $0x24] sm:$0xf]
    %v112 = vld [vmem:[#allocation7 + $0x28] sm:$0xf]
    %v113 = vld [vmem:[#allocation7 + $0x2c] sm:$0xf]
    %v114 = vld [vmem:[#allocation7 + $0x30] sm:$0xf]
    %v115 = vld [vmem:[#allocation7 + $0x34] sm:$0xf]
    %v116 = vld [vmem:[#allocation7 + $0x38] sm:$0xf]
    %v117 = vld [vmem:[#allocation7 + $0x3c] sm:$0xf]
    %v118 = vlaneseq
    %v119 = vshrl.u32 %v118, 7
    %v120 = vsub.s32 2, %v119
    %v121 = vrot.slane %v71, %v120
    %v138 = vunpack.c.l.b16 %v102
    %v139 = vunpack.c.l.b16 %v103
    %v140 = vunpack.c.l.b16 %v104
    %v141 = vunpack.c.l.b16 %v105
    %v142 = vunpack.c.l.b16 %v106
    %v143 = vunpack.c.l.b16 %v107
    %v144 = vunpack.c.l.b16 %v108
    %v145 = vunpack.c.l.b16 %v109
    %v146 = vunpack.c.l.b16 %v110
    %v147 = vunpack.c.l.b16 %v111
    %v148 = vunpack.c.l.b16 %v112
    %v149 = vunpack.c.l.b16 %v113
    %v150 = vunpack.c.l.b16 %v114
    %v151 = vunpack.c.l.b16 %v115
    %v152 = vunpack.c.l.b16 %v116
    %v153 = vunpack.c.l.b16 %v117
    %v154 = vpack.c.b16 %v139, %v138
    %v155 = vpack.c.b16 %v141, %v140
    %v156 = vpack.c.b16 %v143, %v142
    %v157 = vpack.c.b16 %v145, %v144
    %v158 = vpack.c.b16 %v147, %v146
    %v159 = vpack.c.b16 %v149, %v148
    %v160 = vpack.c.b16 %v151, %v150
    %v161 = vpack.c.b16 %v153, %v152
    %170 = vmatprep.subr.bf16.mxu0 0
    %171 = vmatpush1.bf16.msra.mxu0 %v161
    %172 = vmatprep.subr.bf16.mxu0 0
    %173 = vmatpush1.bf16.msra.mxu0 %v160
    %174 = vmatprep.subr.bf16.mxu0 0
    %175 = vmatpush1.bf16.msra.mxu0 %v159
    %176 = vmatprep.subr.bf16.mxu0 0
    %177 = vmatpush1.bf16.msra.mxu0 %v158
    %178 = vmatprep.subr.bf16.mxu0 0
    %179 = vmatpush1.bf16.msra.mxu0 %v157
    %180 = vmatprep.subr.bf16.mxu0 0
    %181 = vmatpush1.bf16.msra.mxu0 %v156
    %182 = vmatprep.subr.bf16.mxu0 0
    %183 = vmatpush1.bf16.msra.mxu0 %v155
    %184 = vmatprep.subr.bf16.mxu0 0
    %185 = vmatpush1.bf16.msra.mxu0 %v154
    %186 = vmatprep.subr.bf16.mxu0 0
    %187 = vmatpush2.bf16.msra.mxu0 0
    %188 = vmatprep.subr.bf16.mxu0 0
    %189 = vmatpush2.bf16.msra.mxu0 0
    %190 = vmatprep.subr.bf16.mxu0 0
    %191 = vmatpush2.bf16.msra.mxu0 0
    %192 = vmatprep.subr.bf16.mxu0 0
    %193 = vmatpush2.bf16.msra.mxu0 0
    %194 = vmatprep.subr.bf16.mxu0 0
    %195 = vmatpush2.bf16.msra.mxu0 0
    %196 = vmatprep.subr.bf16.mxu0 0
    %197 = vmatpush2.bf16.msra.mxu0 0
    %198 = vmatprep.subr.bf16.mxu0 0
    %199 = vmatpush2.bf16.msra.mxu0 0
    %200 = vmatprep.subr.bf16.mxu0 0
    %201 = vmatpush2.bf16.msra.mxu0 0
    %202 = vmatprep.mubr.bf16.mxu0 0
    %203 = vmatmul.mubr.bf16.gmra.mxu0 %v101
    %v204 = vpop.f32.mrf.mxu0
    %v205 = vadd.f32 %v121, %v204
    %v206 = vpop.f32.mrf.mxu0
    %v207 = vpop.f32.mrf.mxu0
    %v208 = vpop.f32.mrf.mxu0
    %209 = vdwg.mxu0
    %v210 = vmul.f32 %v205, %v100
    %v211 = vrot.slane %v210, 4
    %v212 = vadd.f32 %v210, %v211
    %v213 = vrot.slane %v212, 2
    %v214 = vadd.f32 %v212, %v213
    %v215 = vrot.slane %v214, 1
    %v216 = vadd.f32 %v214, %v215
    %v217 = vmul.f32 %v216, 0.125
    %v218 = vmul.f32 %v210, %v205
    %v219 = vrot.slane %v218, 4
    %v220 = vadd.f32 %v218, %v219
    %v221 = vrot.slane %v220, 2
    %v222 = vadd.f32 %v220, %v221
    %v223 = vrot.slane %v222, 1
    %v224 = vadd.f32 %v222, %v223
    %v225 = vmul.f32 %v224, 0.125
    %v226 = vmul.f32 %v217, %v217
    %v227 = vsub.f32 %v225, %v226
    %v228 = vmax.f32 %v227, 0.0
    %v229 = vsub.f32 %v205, %v217
    %v230 = vadd.f32 %v228, 1e-05
    %v231 = vrsqrt.pop %v230
    %v232 = vmul.f32 %v229, %v231
    %v233 = vlaneseq
    %v234 = vshrl.u32 %v233, 7
    %v235 = vsub.s32 3, %v234
    %v236 = vrot.slane %v71, %v235
    %v237 = vmul.f32 %v232, %v236
    %v238 = vlaneseq
    %v239 = vshrl.u32 %v238, 7
    %v240 = vsub.s32 4, %v239
    %v241 = vrot.slane %v71, %v240
    %v242 = vadd.f32 %v237, %v241
    %v243 = vmax.f32 %v242, 0.0
    %v244 = vpack.c.bf16 %v243, %v243
    %v245 = vld [vmem:[#allocation8] sm:$0xf]
    %v246 = vld [vmem:[#allocation8 + $0x4] sm:$0xf]
    %v247 = vld [vmem:[#allocation8 + $0x8] sm:$0xf]
    %v248 = vld [vmem:[#allocation8 + $0xc] sm:$0xf]
    %v249 = vld [vmem:[#allocation8 + $0x10] sm:$0xf]
    %v250 = vld [vmem:[#allocation8 + $0x14] sm:$0xf]
    %v251 = vld [vmem:[#allocation8 + $0x18] sm:$0xf]
    %v252 = vld [vmem:[#allocation8 + $0x1c] sm:$0xf]
    %v253 = vld [vmem:[#allocation8 + $0x20] sm:$0xf]
    %v254 = vld [vmem:[#allocation8 + $0x24] sm:$0xf]
    %v255 = vld [vmem:[#allocation8 + $0x28] sm:$0xf]
    %v256 = vld [vmem:[#allocation8 + $0x2c] sm:$0xf]
    %v257 = vld [vmem:[#allocation8 + $0x30] sm:$0xf]
    %v258 = vld [vmem:[#allocation8 + $0x34] sm:$0xf]
    %v259 = vld [vmem:[#allocation8 + $0x38] sm:$0xf]
    %v260 = vld [vmem:[#allocation8 + $0x3c] sm:$0xf]
    %v261 = vlaneseq
    %v262 = vshrl.u32 %v261, 7
    %v263 = vsub.s32 5, %v262
    %v264 = vrot.slane %v71, %v263
    %v281 = vunpack.c.l.b16 %v245
    %v282 = vunpack.c.l.b16 %v246
    %v283 = vunpack.c.l.b16 %v247
    %v284 = vunpack.c.l.b16 %v248
    %v285 = vunpack.c.l.b16 %v249
    %v286 = vunpack.c.l.b16 %v250
    %v287 = vunpack.c.l.b16 %v251
    %v288 = vunpack.c.l.b16 %v252
    %v289 = vunpack.c.l.b16 %v253
    %v290 = vunpack.c.l.b16 %v254
    %v291 = vunpack.c.l.b16 %v255
    %v292 = vunpack.c.l.b16 %v256
    %v293 = vunpack.c.l.b16 %v257
    %v294 = vunpack.c.l.b16 %v258
    %v295 = vunpack.c.l.b16 %v259
    %v296 = vunpack.c.l.b16 %v260
    %v297 = vpack.c.b16 %v282, %v281
    %v298 = vpack.c.b16 %v284, %v283
    %v299 = vpack.c.b16 %v286, %v285
    %v300 = vpack.c.b16 %v288, %v287
    %v301 = vpack.c.b16 %v290, %v289
    %v302 = vpack.c.b16 %v292, %v291
    %v303 = vpack.c.b16 %v294, %v293
    %v304 = vpack.c.b16 %v296, %v295
    %313 = vmatprep.subr.bf16.mxu0 0
    %314 = vmatpush1.bf16.msra.mxu0 %v304
    %315 = vmatprep.subr.bf16.mxu0 0
    %316 = vmatpush1.bf16.msra.mxu0 %v303
    %317 = vmatprep.subr.bf16.mxu0 0
    %318 = vmatpush1.bf16.msra.mxu0 %v302
    %319 = vmatprep.subr.bf16.mxu0 0
    %320 = vmatpush1.bf16.msra.mxu0 %v301
    %321 = vmatprep.subr.bf16.mxu0 0
    %322 = vmatpush1.bf16.msra.mxu0 %v300
    %323 = vmatprep.subr.bf16.mxu0 0
    %324 = vmatpush1.bf16.msra.mxu0 %v299
    %325 = vmatprep.subr.bf16.mxu0 0
    %326 = vmatpush1.bf16.msra.mxu0 %v298
    %327 = vmatprep.subr.bf16.mxu0 0
    %328 = vmatpush1.bf16.msra.mxu0 %v297
    %329 = vmatprep.subr.bf16.mxu0 0
    %330 = vmatpush2.bf16.msra.mxu0 0
    %331 = vmatprep.subr.bf16.mxu0 0
    %332 = vmatpush2.bf16.msra.mxu0 0
    %333 = vmatprep.subr.bf16.mxu0 0
    %334 = vmatpush2.bf16.msra.mxu0 0
    %335 = vmatprep.subr.bf16.mxu0 0
    %336 = vmatpush2.bf16.msra.mxu0 0
    %337 = vmatprep.subr.bf16.mxu0 0
    %338 = vmatpush2.bf16.msra.mxu0 0
    %339 = vmatprep.subr.bf16.mxu0 0
    %340 = vmatpush2.bf16.msra.mxu0 0
    %341 = vmatprep.subr.bf16.mxu0 0
    %342 = vmatpush2.bf16.msra.mxu0 0
    %343 = vmatprep.subr.bf16.mxu0 0
    %344 = vmatpush2.bf16.msra.mxu0 0
    %345 = vmatprep.mubr.bf16.mxu0 0
    %346 = vmatmul.mubr.bf16.gmra.mxu0 %v244
    %v347 = vpop.f32.mrf.mxu0
    %v348 = vadd.f32 %v264, %v347
    %v349 = vpop.f32.mrf.mxu0
    %v350 = vpop.f32.mrf.mxu0
    %v351 = vpop.f32.mrf.mxu0
    %352 = vdwg.mxu0
    %v353 = vmul.f32 %v348, %v100
    %v354 = vrot.slane %v353, 4
    %v355 = vadd.f32 %v353, %v354
    %v356 = vrot.slane %v355, 2
    %v357 = vadd.f32 %v355, %v356
    %v358 = vrot.slane %v357, 1
    %v359 = vadd.f32 %v357, %v358
    %v360 = vmul.f32 %v359, 0.125
    %v361 = vmul.f32 %v353, %v348
    %v362 = vrot.slane %v361, 4
    %v363 = vadd.f32 %v361, %v362
    %v364 = vrot.slane %v363, 2
    %v365 = vadd.f32 %v363, %v364
    %v366 = vrot.slane %v365, 1
    %v367 = vadd.f32 %v365, %v366
    %v368 = vmul.f32 %v367, 0.125
    %v369 = vmul.f32 %v360, %v360
    %v370 = vsub.f32 %v368, %v369
    %v371 = vmax.f32 %v370, 0.0
    %v372 = vsub.f32 %v348, %v360
    %v373 = vadd.f32 %v371, 1e-05
    %v374 = vrsqrt.pop %v373
    %v375 = vmul.f32 %v372, %v374
    %v376 = vlaneseq
    %v377 = vshrl.u32 %v376, 7
    %v378 = vsub.s32 6, %v377
    %v379 = vrot.slane %v71, %v378
    %v380 = vmul.f32 %v375, %v379
    %v381 = vlaneseq
    %v382 = vshrl.u32 %v381, 7
    %v383 = vsub.s32 7, %v382
    %v384 = vrot.slane %v71, %v383
    %v385 = vadd.f32 %v380, %v384
    %v386 = vadd.f32 %v385, %v95
    %v387 = vmax.f32 %v386, 0.0
    %388 = vst [vmem:[#allocation10] sm:$0xff] %v387
    // Predicated region
    $region34: #{tpu_custom_call.1} parent=1 // pred_check
      _
    $region35: #{tpu_custom_call.1} parent=1 // pred_check_branch
      %390 = sbr.rel (0) target = $region37
    $region36: #{tpu_custom_call.1} parent=1 // pred_region
      %s392 = ssub.s32 128, 128
      %393 = vsyncadd [#allocation4], %s392
      %s395 = sshll.u32 [#allocation10], 4
      %s396 = int_to_ptr.vmem [resolvable:$true] %s395
      %398 = dma.vmem_to_hbm [thread:$0]  %s396, 128, %s4, [#allocation4]
    $region37: #{tpu_custom_call.1} parent=1 // pred_fallthru
      _
    // Predicated region
    $region38: #{tpu_custom_call.1} parent=1 // pred_check
      _
    $region39: #{tpu_custom_call.1} parent=1 // pred_check_branch
      %400 = sbr.rel (0) target = $region41
    $region40: #{tpu_custom_call.1} parent=1 // pred_region
      %401 = dma.done [#allocation4], 128
    $region41: #{tpu_custom_call.1} parent=1 // pred_fallthru
      _
    %402 = vsyncpa [#allocation3], 1
    %403 = vsyncpa [#allocation6], 1
    %404 = vsyncpa [#allocation9], 1
    %405 = vsyncpa [#allocation4], 1

</llo_original>
